<compile_context>
chip_gen: v5e
topology: v5e:2x2
jax: 0.10.0
libtpu: 0.0.40
codegen_flags: <defaults>
</compile_context>

<pallas_src>
import functools

import jax
import jax.numpy as jnp
from jax.experimental import pallas as pl
from jax.experimental.pallas import tpu as pltpu

EPS = 1e-5  # torch.nn.LayerNorm default


def _fused_prenorm_kernel(v_ref, p_ref, wv_ref, bv_ref, wp_ref, bp_ref,
                          vo_ref, po_ref, *, inv_d):
    """One row-tile: LayerNorm(value) and LayerNorm(pos) over the last axis."""

    def _ln(x_ref, w_ref, b_ref, o_ref):
        x = x_ref[...].astype(jnp.float32)                     # (TR, D)
        mean = jnp.sum(x, axis=-1, keepdims=True) * inv_d      # XLU row-sum
        xc = x - mean
        var = jnp.sum(xc * xc, axis=-1, keepdims=True) * inv_d  # biased var (torch LN)
        y = xc * jax.lax.rsqrt(var + EPS) * w_ref[...] + b_ref[...]  # rsqrt -> EUP
        o_ref[...] = y.astype(o_ref.dtype)

    _ln(v_ref, wv_ref, bv_ref, vo_ref)
    _ln(p_ref, wp_ref, bp_ref, po_ref)


def _round_up(x, m):
    return ((x + m - 1) // m) * m


def _vmem_budget_and_limit():
    """Generation-aware (resident-tile budget, scoped VMEM limit) in bytes."""
    try:
        cap = pltpu.get_tpu_info().vmem_capacity_bytes
    except Exception:  # pragma: no cover - conservative fallback
        cap = 64 * 1024 * 1024
    if cap >= 100 * 1024 * 1024:                # v5e / v6e: 128 MiB per TC
        return 24 * 1024 * 1024, 64 * 1024 * 1024
    return 16 * 1024 * 1024, 48 * 1024 * 1024   # v7x: 64 MiB per TC


def _choose_tile_rows(rows, d, itemsize, vmem_budget):
    """Largest sublane-aligned row tile that fits the double-buffered budget."""
    sublane = 8 if itemsize >= 4 else (16 if itemsize == 2 else 32)
    # Resident bytes per row per grid step:
    #   2 inputs + 2 outputs, each double-buffered by the pipeline -> 8*d*itemsize
    #   plus ~2 tile-sized f32 intermediates per LayerNorm          -> 4*d*4
    per_row = 8 * d * itemsize + 4 * d * 4
    t = max(sublane, min(vmem_budget // per_row, 2048))
    # Keep at least 2 grid steps so the "parallel" row axis can spread across
    # both TensorCores on v7x (and so tiny inputs don't get a giant tile).
    t = min(t, _round_up(pl.cdiv(rows, 2), sublane))
    t = max(sublane, (t // sublane) * sublane)
    return int(t)


def fused_pre_norm(value, pos, wv, bv, wp, bp):
    """Fused LayerNorm(value) and LayerNorm(pos) over the last axis D."""
    assert value.shape == pos.shape, "value and pos must share a shape"
    orig_shape = value.shape
    D = orig_shape[-1]
    v2 = value.reshape(-1, D)          # free view in XLA
    p2 = pos.reshape(-1, D)
    R = v2.shape[0]

    itemsize = jnp.dtype(value.dtype).itemsize
    budget, vmem_limit = _vmem_budget_and_limit()
    tile_rows = _choose_tile_rows(R, D, itemsize, budget)
    grid = (pl.cdiv(R, tile_rows),)    # boundary blocks handle the remainder

    # Upcast params once in the wrapper; kernel sees f32 directly.
    wv2 = wv.astype(jnp.float32).reshape(1, D)
    bv2 = bv.astype(jnp.float32).reshape(1, D)
    wp2 = wp.astype(jnp.float32).reshape(1, D)
    bp2 = bp.astype(jnp.float32).reshape(1, D)

    row_spec = pl.BlockSpec((tile_rows, D), lambda i: (i, 0))
    par_spec = pl.BlockSpec((1, D), lambda i: (0, 0))
    kernel = functools.partial(_fused_prenorm_kernel, inv_d=1.0 / D)

    v_out, p_out = pl.pallas_call(
        kernel,
        out_shape=(jax.ShapeDtypeStruct((R, D), value.dtype),
                   jax.ShapeDtypeStruct((R, D), pos.dtype)),
        grid_spec=pltpu.PrefetchScalarGridSpec(
            num_scalar_prefetch=0,
            grid=grid,
            in_specs=[row_spec, row_spec, par_spec, par_spec, par_spec, par_spec],
            out_specs=(row_spec, row_spec),
        ),
        compiler_params=pltpu.CompilerParams(
            dimension_semantics=("parallel",),
            vmem_limit_bytes=vmem_limit),
    )(v2, p2, wv2, bv2, wp2, bp2)

    return v_out.reshape(orig_shape), p_out.reshape(orig_shape)


def pre_norm_forward(input_t, params):
    """PreNorm.forward: normalize value & pos, pass mask through, then fn."""
    value, pos, x_mask = input_t
    value_out, pos_out = fused_pre_norm(
        value, pos, *params["norm_value"], *params["norm_pos"])
    # TODO(synk): self.fn is an externally supplied module; treated as identity here.
    return (value_out, pos_out, x_mask)


def _layernorm_ref(x, w, b):
    xf = x.astype(jnp.float32)
    mean = jnp.mean(xf, axis=-1, keepdims=True)
    var = jnp.mean((xf - mean) ** 2, axis=-1, keepdims=True)
    return ((xf - mean) * jax.lax.rsqrt(var + EPS) * w + b).astype(x.dtype)


def _run_case(key, B, N, D):
    k_val, k_pos, k_wv, k_bv, k_wp, k_bp = jax.random.split(key, 6)
    value = jax.random.normal(k_val, (B, N, D), dtype=jnp.float32)
    pos = jax.random.normal(k_pos, (B, N, D), dtype=jnp.float32)
    x_mask = jnp.ones((B, N), dtype=jnp.bool_)
    params = {
        "norm_value": (1.0 + 0.1 * jax.random.normal(k_wv, (D,), jnp.float32),
                       0.1 * jax.random.normal(k_bv, (D,), jnp.float32)),
        "norm_pos": (1.0 + 0.1 * jax.random.normal(k_wp, (D,), jnp.float32),
                     0.1 * jax.random.normal(k_bp, (D,), jnp.float32)),
    }
    value_out, pos_out, mask_out = jax.block_until_ready(
        pre_norm_forward((value, pos, x_mask), params))

    ref_v = _layernorm_ref(value, *params["norm_value"])
    ref_p = _layernorm_ref(pos, *params["norm_pos"])
    assert jnp.allclose(value_out, ref_v, atol=1e-5, rtol=1e-5)
    assert jnp.allclose(pos_out, ref_p, atol=1e-5, rtol=1e-5)
    assert bool(jnp.all(mask_out == x_mask))


if __name__ == "__main__":
    key = jax.random.PRNGKey(0)
    k0, k1 = jax.random.split(key)
    # Small module-consistent shape (batch=2, tokens=8, dim=32).
    _run_case(k0, B=2, N=8, D=32)
    # Ragged case: rows not a tile multiple (exercises the cdiv-grid boundary
    # block) and D not a multiple of 128 (full-D block, no lane padding).
    _run_case(k1, B=2, N=11, D=48)
    print("KERNEL_OK")
</pallas_src>

<mosaic_0001>
module attributes {stable_mosaic.version = 11 : i64} {
  func.func @_fused_prenorm_kernel(%arg0: i32, %arg1: memref<8x32xf32, #tpu.memory_space<vmem>>, %arg2: memref<8x32xf32, #tpu.memory_space<vmem>>, %arg3: memref<1x32xf32, #tpu.memory_space<vmem>>, %arg4: memref<1x32xf32, #tpu.memory_space<vmem>>, %arg5: memref<1x32xf32, #tpu.memory_space<vmem>>, %arg6: memref<1x32xf32, #tpu.memory_space<vmem>>, %arg7: memref<8x32xf32, #tpu.memory_space<vmem>>, %arg8: memref<8x32xf32, #tpu.memory_space<vmem>>) attributes {dimension_semantics = [#tpu.dimension_semantics<parallel>], iteration_bounds = array<i64: 2>, scalar_prefetch = 0 : i64, scratch_operands = 0 : i64, tpu.core_type = #tpu.core_type<tc>, window_params = [{transform_indices = @transform_0, window_bounds = array<i64: 8, 32>}, {transform_indices = @transform_1, window_bounds = array<i64: 8, 32>}, {pipeline_mode = #tpu.pipeline_mode<synchronous>, transform_indices = @transform_2, window_bounds = array<i64: 1, 32>}, {pipeline_mode = #tpu.pipeline_mode<synchronous>, transform_indices = @transform_3, window_bounds = array<i64: 1, 32>}, {pipeline_mode = #tpu.pipeline_mode<synchronous>, transform_indices = @transform_4, window_bounds = array<i64: 1, 32>}, {pipeline_mode = #tpu.pipeline_mode<synchronous>, transform_indices = @transform_5, window_bounds = array<i64: 1, 32>}, {transform_indices = @transform_6, window_bounds = array<i64: 8, 32>}, {transform_indices = @transform_7, window_bounds = array<i64: 8, 32>}]} {
    %c0 = arith.constant 0 : index
    %c0_0 = arith.constant 0 : index
    %0 = vector.load %arg1[%c0, %c0_0] : memref<8x32xf32, #tpu.memory_space<vmem>>, vector<8x32xf32>
    %cst = arith.constant dense<0.000000e+00> : vector<8xf32>
    %1 = vector.multi_reduction <add>, %0, %cst [1] : vector<8x32xf32> to vector<8xf32>
    %2 = vector.shape_cast %1 : vector<8xf32> to vector<8x1xf32>
    %cst_1 = arith.constant 3.125000e-02 : f32
    %3 = vector.broadcast %cst_1 : f32 to vector<8x1xf32>
    %4 = arith.mulf %2, %3 : vector<8x1xf32>
    %5 = vector.broadcast %4 : vector<8x1xf32> to vector<8x32xf32>
    %6 = arith.subf %0, %5 : vector<8x32xf32>
    %7 = arith.mulf %6, %6 : vector<8x32xf32>
    %cst_2 = arith.constant dense<0.000000e+00> : vector<8xf32>
    %8 = vector.multi_reduction <add>, %7, %cst_2 [1] : vector<8x32xf32> to vector<8xf32>
    %9 = vector.shape_cast %8 : vector<8xf32> to vector<8x1xf32>
    %cst_3 = arith.constant 3.125000e-02 : f32
    %10 = vector.broadcast %cst_3 : f32 to vector<8x1xf32>
    %11 = arith.mulf %9, %10 : vector<8x1xf32>
    %cst_4 = arith.constant 9.99999974E-6 : f32
    %12 = vector.broadcast %cst_4 : f32 to vector<8x1xf32>
    %13 = arith.addf %11, %12 : vector<8x1xf32>
    %14 = math.rsqrt %13 : vector<8x1xf32>
    %15 = vector.broadcast %14 : vector<8x1xf32> to vector<8x32xf32>
    %16 = arith.mulf %6, %15 : vector<8x32xf32>
    %c0_5 = arith.constant 0 : index
    %c0_6 = arith.constant 0 : index
    %17 = vector.load %arg3[%c0_5, %c0_6] : memref<1x32xf32, #tpu.memory_space<vmem>>, vector<1x32xf32>
    %18 = vector.broadcast %17 : vector<1x32xf32> to vector<8x32xf32>
    %19 = arith.mulf %16, %18 : vector<8x32xf32>
    %c0_7 = arith.constant 0 : index
    %c0_8 = arith.constant 0 : index
    %20 = vector.load %arg4[%c0_7, %c0_8] : memref<1x32xf32, #tpu.memory_space<vmem>>, vector<1x32xf32>
    %21 = vector.broadcast %20 : vector<1x32xf32> to vector<8x32xf32>
    %22 = arith.addf %19, %21 : vector<8x32xf32>
    %c0_9 = arith.constant 0 : index
    %c0_10 = arith.constant 0 : index
    %23 = vector.load %arg7[%c0_9, %c0_10] : memref<8x32xf32, #tpu.memory_space<vmem>>, vector<8x32xf32>
    tpu.vector_store %arg7[%c0_9, %c0_10], %22 {strides = array<i32>} : memref<8x32xf32, #tpu.memory_space<vmem>>, vector<8x32xf32>,
    %c0_11 = arith.constant 0 : index
    %c0_12 = arith.constant 0 : index
    %24 = vector.load %arg2[%c0_11, %c0_12] : memref<8x32xf32, #tpu.memory_space<vmem>>, vector<8x32xf32>
    %cst_13 = arith.constant dense<0.000000e+00> : vector<8xf32>
    %25 = vector.multi_reduction <add>, %24, %cst_13 [1] : vector<8x32xf32> to vector<8xf32>
    %26 = vector.shape_cast %25 : vector<8xf32> to vector<8x1xf32>
    %cst_14 = arith.constant 3.125000e-02 : f32
    %27 = vector.broadcast %cst_14 : f32 to vector<8x1xf32>
    %28 = arith.mulf %26, %27 : vector<8x1xf32>
    %29 = vector.broadcast %28 : vector<8x1xf32> to vector<8x32xf32>
    %30 = arith.subf %24, %29 : vector<8x32xf32>
    %31 = arith.mulf %30, %30 : vector<8x32xf32>
    %cst_15 = arith.constant dense<0.000000e+00> : vector<8xf32>
    %32 = vector.multi_reduction <add>, %31, %cst_15 [1] : vector<8x32xf32> to vector<8xf32>
    %33 = vector.shape_cast %32 : vector<8xf32> to vector<8x1xf32>
    %cst_16 = arith.constant 3.125000e-02 : f32
    %34 = vector.broadcast %cst_16 : f32 to vector<8x1xf32>
    %35 = arith.mulf %33, %34 : vector<8x1xf32>
    %cst_17 = arith.constant 9.99999974E-6 : f32
    %36 = vector.broadcast %cst_17 : f32 to vector<8x1xf32>
    %37 = arith.addf %35, %36 : vector<8x1xf32>
    %38 = math.rsqrt %37 : vector<8x1xf32>
    %39 = vector.broadcast %38 : vector<8x1xf32> to vector<8x32xf32>
    %40 = arith.mulf %30, %39 : vector<8x32xf32>
    %c0_18 = arith.constant 0 : index
    %c0_19 = arith.constant 0 : index
    %41 = vector.load %arg5[%c0_18, %c0_19] : memref<1x32xf32, #tpu.memory_space<vmem>>, vector<1x32xf32>
    %42 = vector.broadcast %41 : vector<1x32xf32> to vector<8x32xf32>
    %43 = arith.mulf %40, %42 : vector<8x32xf32>
    %c0_20 = arith.constant 0 : index
    %c0_21 = arith.constant 0 : index
    %44 = vector.load %arg6[%c0_20, %c0_21] : memref<1x32xf32, #tpu.memory_space<vmem>>, vector<1x32xf32>
    %45 = vector.broadcast %44 : vector<1x32xf32> to vector<8x32xf32>
    %46 = arith.addf %43, %45 : vector<8x32xf32>
    %c0_22 = arith.constant 0 : index
    %c0_23 = arith.constant 0 : index
    %47 = vector.load %arg8[%c0_22, %c0_23] : memref<8x32xf32, #tpu.memory_space<vmem>>, vector<8x32xf32>
    tpu.vector_store %arg8[%c0_22, %c0_23], %46 {strides = array<i32>} : memref<8x32xf32, #tpu.memory_space<vmem>>, vector<8x32xf32>,
    return
  }
  func.func @transform_0(%arg0: i32) -> (i32, i32) {
    %c0_i32 = arith.constant 0 : i32
    %c0_i32_0 = arith.constant 0 : i32
    return %arg0, %c0_i32 : i32, i32
  }
  func.func @transform_1(%arg0: i32) -> (i32, i32) {
    %c0_i32 = arith.constant 0 : i32
    %c0_i32_0 = arith.constant 0 : i32
    return %arg0, %c0_i32 : i32, i32
  }
  func.func @transform_2(%arg0: i32) -> (i32, i32) {
    %c0_i32 = arith.constant 0 : i32
    %c0_i32_0 = arith.constant 0 : i32
    %c0_i32_1 = arith.constant 0 : i32
    return %c0_i32, %c0_i32_0 : i32, i32
  }
  func.func @transform_3(%arg0: i32) -> (i32, i32) {
    %c0_i32 = arith.constant 0 : i32
    %c0_i32_0 = arith.constant 0 : i32
    %c0_i32_1 = arith.constant 0 : i32
    return %c0_i32, %c0_i32_0 : i32, i32
  }
  func.func @transform_4(%arg0: i32) -> (i32, i32) {
    %c0_i32 = arith.constant 0 : i32
    %c0_i32_0 = arith.constant 0 : i32
    %c0_i32_1 = arith.constant 0 : i32
    return %c0_i32, %c0_i32_0 : i32, i32
  }
  func.func @transform_5(%arg0: i32) -> (i32, i32) {
    %c0_i32 = arith.constant 0 : i32
    %c0_i32_0 = arith.constant 0 : i32
    %c0_i32_1 = arith.constant 0 : i32
    return %c0_i32, %c0_i32_0 : i32, i32
  }
  func.func @transform_6(%arg0: i32) -> (i32, i32) {
    %c0_i32 = arith.constant 0 : i32
    %c0_i32_0 = arith.constant 0 : i32
    return %arg0, %c0_i32 : i32, i32
  }
  func.func @transform_7(%arg0: i32) -> (i32, i32) {
    %c0_i32 = arith.constant 0 : i32
    %c0_i32_0 = arith.constant 0 : i32
    return %arg0, %c0_i32 : i32, i32
  }
}

</mosaic_0001>

<llo_original>
// kernel: tpu_custom_call.1
$region0: #{tpu_custom_call.1}
  #allocation0 [shape = 'u32[]', space=smem, size = 0x4, offset = 0x4, fixed_abs, tag = 'smem constant byte address 0x4 - core index']
  #allocation1 [shape = 'u32[72,128]{1,0:T(1,128)}', space=vmem, size = 0x9000, scoped, tag = 'internal scratch']
  %s0 = inlined_call_operand.hbm [shape: f32[16,32], index: 0, kind: input, shape index: {}]
  %s1 = inlined_call_operand.hbm [shape: f32[16,32], index: 1, kind: input, shape index: {}]
  %s2 = inlined_call_operand.vmem [shape: f32[1,32], index: 2, kind: input, shape index: {}]
  %s3 = inlined_call_operand.vmem [shape: f32[1,32], index: 3, kind: input, shape index: {}]
  %s4 = inlined_call_operand.vmem [shape: f32[1,32], index: 4, kind: input, shape index: {}]
  %s5 = inlined_call_operand.vmem [shape: f32[1,32], index: 5, kind: input, shape index: {}]
  %s6 = inlined_call_operand.hbm [shape: f32[16,32], index: 6, kind: output, shape index: {0}]
  %s7 = inlined_call_operand.hbm [shape: f32[16,32], index: 7, kind: output, shape index: {1}]
  %8 = xla_tuple %s6, %s7
  %s9 = sld [smem:[#allocation0]]
  $region73: #{tpu_custom_call.1} parent=0
    _
  %s11 = ssub.s32 1, %s9
  %s12 = scalar_select 0, %s11, %s9
  $region1: #{tpu_custom_call.1} parent=0
    #allocation2 [shape = 'u8[8192]{0}', space=vmem, size = 0x2000, scoped, tag = 'input window, operand 0']
    #allocation3 [shape = 's32[2]{0}', space=sflag, size = 0x8, scoped, tag = 'scoped memory for tpu_custom_call.1']
    #allocation4 [shape = 's32[2]{0}', space=sflag, size = 0x8, scoped, tag = 'scoped memory for tpu_custom_call.1']
    #allocation5 [shape = 'u8[8192]{0}', space=vmem, size = 0x2000, scoped, tag = 'input window, operand 1']
    #allocation6 [shape = 's32[2]{0}', space=sflag, size = 0x8, scoped, tag = 'scoped memory for tpu_custom_call.1']
    #allocation7 [shape = 'u8[8192]{0}', space=vmem, size = 0x2000, scoped, tag = 'output window, operand 0']
    #allocation8 [shape = 'u8[8192]{0}', space=vmem, size = 0x2000, scoped, tag = 'output window, operand 1']
    #allocation9 [shape = 's32[2]{0}', space=sflag, size = 0x8, scoped, tag = 'scoped memory for tpu_custom_call.1']
    %13 = vsyncpa [#allocation3], 0
    %s14 = scalar_lea.sflag [#allocation3], 1
    %15 = vsyncpa %s14, 0
    %16 = vsyncpa [#allocation6], 0
    %s17 = scalar_lea.sflag [#allocation6], 1
    %18 = vsyncpa %s17, 0
    %19 = vsyncpa [#allocation4], 0
    %s20 = scalar_lea.sflag [#allocation4], 1
    %21 = vsyncpa %s20, 0
    %22 = vsyncpa [#allocation9], 0
    %s23 = scalar_lea.sflag [#allocation9], 1
    %24 = vsyncpa %s23, 0
    loop: start=0, step=1, limit=4
    $region2: #{tpu_custom_call.1} parent=1 // loop_pre_header
      _
    $region3: #{tpu_custom_call.1} parent=1 // loop_header
      %s26 = sphi 0, %s30
      %p27 = scmp.ge.s32.totalorder %s26, 4
      %s36 = sphi 0, %s38
      %s39 = sphi 0, %s36
      %s40 = sphi 0, %s39
      %s56 = sphi 0, %s40
      %s62 = sphi 0, %s64
      %s65 = sphi 0, %s62
      %s66 = sphi 0, %s65
      %s82 = sphi 0, %s66
      %s86 = sphi 0, %s86
      %s88 = sphi 0, %s86
      %s89 = sphi 0, %s88
      %s103 = sphi 0, %s89
      %s107 = sphi 0, %s107
      %s109 = sphi 0, %s107
      %s110 = sphi 0, %s109
      %s124 = sphi 0, %s110
      %s128 = sphi 0, %s128
      %s130 = sphi 0, %s128
      %s131 = sphi 0, %s130
      %s145 = sphi 0, %s131
      %s149 = sphi 0, %s149
      %s151 = sphi 0, %s149
      %s152 = sphi 0, %s151
      %s166 = sphi 0, %s152
      %s172 = sphi 0, %s174
      %s175 = sphi 0, %s172
      %s176 = sphi 0, %s175
      %s192 = sphi 0, %s176
      %s198 = sphi 0, %s200
      %s201 = sphi 0, %s198
      %s202 = sphi 0, %s201
      %s218 = sphi 0, %s202
    $region4: #{tpu_custom_call.1} parent=1 // loop_header_branch
      %29 = sbr.rel (%p27) target = $region8
    $region5: #{tpu_custom_call.1} parent=1 // loop_body
      %s31 = ssub.s32 %s26, 1
      %s32 = ssub.s32 %s26, 2
      %s33 = sadd.s32 %s26, 1
      %s34 = ssub.s32 %s26, %s33
      %p35 = scmp.eq.s32.totalorder %s34, 0
      %s37 = sadd.s32 %s36, 1
      %s38 = scalar_select %p35, %s36, %s37
      %p41 = pneg %p35
      %p42 = scmp.eq.s32.totalorder %s26, 1
      %p43 = por %p41, %p42
      %p44 = scmp.ne.s32.totalorder %s36, %s39
      %p45 = scmp.eq.s32.totalorder %s26, 0
      %p46 = por %p44, %p45
      %p47 = scmp.ne.s32.totalorder %s36, %s39
      %p48 = scmp.eq.s32.totalorder %s31, 1
      %p49 = por %p47, %p48
      %p50 = scmp.ne.s32.totalorder %s39, %s40
      %p51 = scmp.eq.s32.totalorder %s31, 0
      %p52 = por %p50, %p51
      %p53 = scmp.ne.s32.totalorder %s39, %s40
      %p54 = scmp.eq.s32.totalorder %s32, 1
      %p55 = por %p53, %p54
      %p57 = scmp.ne.s32.totalorder %s40, %s56
      %p58 = scmp.eq.s32.totalorder %s32, 0
      %p59 = por %p57, %p58
      %s60 = ssub.s32 %s26, %s33
      %p61 = scmp.eq.s32.totalorder %s60, 0
      %s63 = sadd.s32 %s62, 1
      %s64 = scalar_select %p61, %s62, %s63
      %p67 = pneg %p61
      %p68 = scmp.eq.s32.totalorder %s26, 1
      %p69 = por %p67, %p68
      %p70 = scmp.ne.s32.totalorder %s62, %s65
      %p71 = scmp.eq.s32.totalorder %s26, 0
      %p72 = por %p70, %p71
      %p73 = scmp.ne.s32.totalorder %s62, %s65
      %p74 = scmp.eq.s32.totalorder %s31, 1
      %p75 = por %p73, %p74
      %p76 = scmp.ne.s32.totalorder %s65, %s66
      %p77 = scmp.eq.s32.totalorder %s31, 0
      %p78 = por %p76, %p77
      %p79 = scmp.ne.s32.totalorder %s65, %s66
      %p80 = scmp.eq.s32.totalorder %s32, 1
      %p81 = por %p79, %p80
      %p83 = scmp.ne.s32.totalorder %s66, %s82
      %p84 = scmp.eq.s32.totalorder %s32, 0
      %p85 = por %p83, %p84
      %s87 = sadd.s32 %s86, 1
      %p90 = scmp.eq.s32.totalorder %s26, 1
      %p91 = scmp.ne.s32.totalorder %s86, %s88
      %p92 = scmp.eq.s32.totalorder %s26, 0
      %p93 = por %p91, %p92
      %p94 = scmp.ne.s32.totalorder %s86, %s88
      %p95 = scmp.eq.s32.totalorder %s31, 1
      %p96 = por %p94, %p95
      %p97 = scmp.ne.s32.totalorder %s88, %s89
      %p98 = scmp.eq.s32.totalorder %s31, 0
      %p99 = por %p97, %p98
      %p100 = scmp.ne.s32.totalorder %s88, %s89
      %p101 = scmp.eq.s32.totalorder %s32, 1
      %p102 = por %p100, %p101
      %p104 = scmp.ne.s32.totalorder %s89, %s103
      %p105 = scmp.eq.s32.totalorder %s32, 0
      %p106 = por %p104, %p105
      %s108 = sadd.s32 %s107, 1
      %p111 = scmp.eq.s32.totalorder %s26, 1
      %p112 = scmp.ne.s32.totalorder %s107, %s109
      %p113 = scmp.eq.s32.totalorder %s26, 0
      %p114 = por %p112, %p113
      %p115 = scmp.ne.s32.totalorder %s107, %s109
      %p116 = scmp.eq.s32.totalorder %s31, 1
      %p117 = por %p115, %p116
      %p118 = scmp.ne.s32.totalorder %s109, %s110
      %p119 = scmp.eq.s32.totalorder %s31, 0
      %p120 = por %p118, %p119
      %p121 = scmp.ne.s32.totalorder %s109, %s110
      %p122 = scmp.eq.s32.totalorder %s32, 1
      %p123 = por %p121, %p122
      %p125 = scmp.ne.s32.totalorder %s110, %s124
      %p126 = scmp.eq.s32.totalorder %s32, 0
      %p127 = por %p125, %p126
      %s129 = sadd.s32 %s128, 1
      %p132 = scmp.eq.s32.totalorder %s26, 1
      %p133 = scmp.ne.s32.totalorder %s128, %s130
      %p134 = scmp.eq.s32.totalorder %s26, 0
      %p135 = por %p133, %p134
      %p136 = scmp.ne.s32.totalorder %s128, %s130
      %p137 = scmp.eq.s32.totalorder %s31, 1
      %p138 = por %p136, %p137
      %p139 = scmp.ne.s32.totalorder %s130, %s131
      %p140 = scmp.eq.s32.totalorder %s31, 0
      %p141 = por %p139, %p140
      %p142 = scmp.ne.s32.totalorder %s130, %s131
      %p143 = scmp.eq.s32.totalorder %s32, 1
      %p144 = por %p142, %p143
      %p146 = scmp.ne.s32.totalorder %s131, %s145
      %p147 = scmp.eq.s32.totalorder %s32, 0
      %p148 = por %p146, %p147
      %s150 = sadd.s32 %s149, 1
      %p153 = scmp.eq.s32.totalorder %s26, 1
      %p154 = scmp.ne.s32.totalorder %s149, %s151
      %p155 = scmp.eq.s32.totalorder %s26, 0
      %p156 = por %p154, %p155
      %p157 = scmp.ne.s32.totalorder %s149, %s151
      %p158 = scmp.eq.s32.totalorder %s31, 1
      %p159 = por %p157, %p158
      %p160 = scmp.ne.s32.totalorder %s151, %s152
      %p161 = scmp.eq.s32.totalorder %s31, 0
      %p162 = por %p160, %p161
      %p163 = scmp.ne.s32.totalorder %s151, %s152
      %p164 = scmp.eq.s32.totalorder %s32, 1
      %p165 = por %p163, %p164
      %p167 = scmp.ne.s32.totalorder %s152, %s166
      %p168 = scmp.eq.s32.totalorder %s32, 0
      %p169 = por %p167, %p168
      %s170 = ssub.s32 %s26, %s33
      %p171 = scmp.eq.s32.totalorder %s170, 0
      %s173 = sadd.s32 %s172, 1
      %s174 = scalar_select %p171, %s172, %s173
      %p177 = pneg %p171
      %p178 = scmp.eq.s32.totalorder %s26, 1
      %p179 = por %p177, %p178
      %p180 = scmp.ne.s32.totalorder %s172, %s175
      %p181 = scmp.eq.s32.totalorder %s26, 0
      %p182 = por %p180, %p181
      %p183 = scmp.ne.s32.totalorder %s172, %s175
      %p184 = scmp.eq.s32.totalorder %s31, 1
      %p185 = por %p183, %p184
      %p186 = scmp.ne.s32.totalorder %s175, %s176
      %p187 = scmp.eq.s32.totalorder %s31, 0
      %p188 = por %p186, %p187
      %p189 = scmp.ne.s32.totalorder %s175, %s176
      %p190 = scmp.eq.s32.totalorder %s32, 1
      %p191 = por %p189, %p190
      %p193 = scmp.ne.s32.totalorder %s176, %s192
      %p194 = scmp.eq.s32.totalorder %s32, 0
      %p195 = por %p193, %p194
      %s196 = ssub.s32 %s26, %s33
      %p197 = scmp.eq.s32.totalorder %s196, 0
      %s199 = sadd.s32 %s198, 1
      %s200 = scalar_select %p197, %s198, %s199
      %p203 = pneg %p197
      %p204 = scmp.eq.s32.totalorder %s26, 1
      %p205 = por %p203, %p204
      %p206 = scmp.ne.s32.totalorder %s198, %s201
      %p207 = scmp.eq.s32.totalorder %s26, 0
      %p208 = por %p206, %p207
      %p209 = scmp.ne.s32.totalorder %s198, %s201
      %p210 = scmp.eq.s32.totalorder %s31, 1
      %p211 = por %p209, %p210
      %p212 = scmp.ne.s32.totalorder %s201, %s202
      %p213 = scmp.eq.s32.totalorder %s31, 0
      %p214 = por %p212, %p213
      %p215 = scmp.ne.s32.totalorder %s201, %s202
      %p216 = scmp.eq.s32.totalorder %s32, 1
      %p217 = por %p215, %p216
      %p219 = scmp.ne.s32.totalorder %s202, %s218
      %p220 = scmp.eq.s32.totalorder %s32, 0
      %p221 = por %p219, %p220
      %p222 = scmp.le.s32.totalorder 1, %s26
      %p223 = scmp.lt.s32.totalorder %s26, 3
      %p224 = pnand %p222, %p223
      %p225 = pneg %p224
      // Predicated region
      $region9: #{tpu_custom_call.1} parent=5 // pred_check
        _
      $region10: #{tpu_custom_call.1} parent=5 // pred_check_branch
        %227 = sbr.rel (%p224) target = $region12
      $region11: #{tpu_custom_call.1} parent=5 // pred_region
        %s228 = ssub.s32 %s26, 1
        // Predicated region
        $region13: #{tpu_custom_call.1} parent=11 // pred_check
          %p229 = pneg %p99
        $region14: #{tpu_custom_call.1} parent=11 // pred_check_branch
          %231 = sbr.rel (%p229) target = $region16
        $region15: #{tpu_custom_call.1} parent=11 // pred_region
          _
        $region16: #{tpu_custom_call.1} parent=11 // pred_fallthru
          _
        // Predicated region
        $region17: #{tpu_custom_call.1} parent=11 // pred_check
          %p232 = pneg %p120
        $region18: #{tpu_custom_call.1} parent=11 // pred_check_branch
          %234 = sbr.rel (%p232) target = $region20
        $region19: #{tpu_custom_call.1} parent=11 // pred_region
          _
        $region20: #{tpu_custom_call.1} parent=11 // pred_fallthru
          _
        // Predicated region
        $region21: #{tpu_custom_call.1} parent=11 // pred_check
          %p235 = pneg %p141
        $region22: #{tpu_custom_call.1} parent=11 // pred_check_branch
          %237 = sbr.rel (%p235) target = $region24
        $region23: #{tpu_custom_call.1} parent=11 // pred_region
          _
        $region24: #{tpu_custom_call.1} parent=11 // pred_fallthru
          _
        // Predicated region
        $region25: #{tpu_custom_call.1} parent=11 // pred_check
          %p238 = pneg %p162
        $region26: #{tpu_custom_call.1} parent=11 // pred_check_branch
          %240 = sbr.rel (%p238) target = $region28
        $region27: #{tpu_custom_call.1} parent=11 // pred_region
          _
        $region28: #{tpu_custom_call.1} parent=11 // pred_fallthru
          _
      $region12: #{tpu_custom_call.1} parent=5 // pred_fallthru
        _
      %p241 = scmp.lt.s32.totalorder %s26, 2
      // Predicated region
      $region29: #{tpu_custom_call.1} parent=5 // pred_check
        %p242 = pneg %p241
      $region30: #{tpu_custom_call.1} parent=5 // pred_check_branch
        %244 = sbr.rel (%p242) target = $region32
      $region31: #{tpu_custom_call.1} parent=5 // pred_region
        // Predicated region
        $region33: #{tpu_custom_call.1} parent=31 // pred_check
          %p245 = pneg %p46
        $region34: #{tpu_custom_call.1} parent=31 // pred_check_branch
          %247 = sbr.rel (%p245) target = $region36
        $region35: #{tpu_custom_call.1} parent=31 // pred_region
          %s248 = sand.u32 %s36, 1
          %s249 = scalar_lea.sflag [#allocation3], %s248
          %s250 = sand.u32 %s36, 1
          %s251 = smul.addr %s250, 8
          %s252 = scalar_lea.vmem [#allocation2], %s251
          %254 = vsyncadd %s249, 0
          %s255 = smul.addr %s26, 8
          %s256 = scalar_lea.hbm %s0, %s255
          %s258 = sshll.u32 %s256, 4
          %s259 = int_to_ptr.hbm [resolvable:$true] %s258
          %s260 = sshll.u32 %s252, 4
          %s261 = int_to_ptr.vmem [resolvable:$true] %s260
          %263 = dma.hbm_to_vmem [thread:$0]  %s259, 128, %s261, %s249
        $region36: #{tpu_custom_call.1} parent=31 // pred_fallthru
          _
        // Predicated region
        $region37: #{tpu_custom_call.1} parent=31 // pred_check
          %p264 = pneg %p72
        $region38: #{tpu_custom_call.1} parent=31 // pred_check_branch
          %266 = sbr.rel (%p264) target = $region40
        $region39: #{tpu_custom_call.1} parent=31 // pred_region
          %s267 = sand.u32 %s62, 1
          %s268 = scalar_lea.sflag [#allocation6], %s267
          %s269 = sand.u32 %s62, 1
          %s270 = smul.addr %s269, 8
          %s271 = scalar_lea.vmem [#allocation5], %s270
          %273 = vsyncadd %s268, 0
          %s274 = smul.addr %s26, 8
          %s275 = scalar_lea.hbm %s1, %s274
          %s277 = sshll.u32 %s275, 4
          %s278 = int_to_ptr.hbm [resolvable:$true] %s277
          %s279 = sshll.u32 %s271, 4
          %s280 = int_to_ptr.vmem [resolvable:$true] %s279
          %282 = dma.hbm_to_vmem [thread:$0]  %s278, 128, %s280, %s268
        $region40: #{tpu_custom_call.1} parent=31 // pred_fallthru
          _
      $region32: #{tpu_custom_call.1} parent=5 // pred_fallthru
        _
      %p283 = scmp.le.s32.totalorder 1, %s26
      %p284 = scmp.lt.s32.totalorder %s26, 3
      %p285 = pnand %p283, %p284
      %p286 = pneg %p285
      // Predicated region
      $region41: #{tpu_custom_call.1} parent=5 // pred_check
        _
      $region42: #{tpu_custom_call.1} parent=5 // pred_check_branch
        %288 = sbr.rel (%p285) target = $region44
      $region43: #{tpu_custom_call.1} parent=5 // pred_region
        %s289 = ssub.s32 %s26, 1
        %s290 = sand.u32 %s39, 1
        %s291 = scalar_lea.sflag [#allocation3], %s290
        %s292 = sand.u32 %s39, 1
        %s293 = smul.addr %s292, 8
        %s294 = scalar_lea.vmem [#allocation2], %s293
        // Predicated region
        $region45: #{tpu_custom_call.1} parent=43 // pred_check
          %p295 = pneg %p52
        $region46: #{tpu_custom_call.1} parent=43 // pred_check_branch
          %297 = sbr.rel (%p295) target = $region48
        $region47: #{tpu_custom_call.1} parent=43 // pred_region
          %299 = dma.done %s291, 128
        $region48: #{tpu_custom_call.1} parent=43 // pred_fallthru
          _
        %s300 = sand.u32 %s65, 1
        %s301 = scalar_lea.sflag [#allocation6], %s300
        %s302 = sand.u32 %s65, 1
        %s303 = smul.addr %s302, 8
        %s304 = scalar_lea.vmem [#allocation5], %s303
        // Predicated region
        $region49: #{tpu_custom_call.1} parent=43 // pred_check
          %p305 = pneg %p78
        $region50: #{tpu_custom_call.1} parent=43 // pred_check_branch
          %307 = sbr.rel (%p305) target = $region52
        $region51: #{tpu_custom_call.1} parent=43 // pred_region
          %309 = dma.done %s301, 128
        $region52: #{tpu_custom_call.1} parent=43 // pred_fallthru
          _
        %s310 = sand.u32 %s39, 1
        %s311 = scalar_lea.sflag [#allocation3], %s310
        %s312 = sand.u32 %s39, 1
        %s313 = smul.addr %s312, 8
        %s314 = scalar_lea.vmem [#allocation2], %s313
        %p315 = pneg %p52
        %p316 = pneg %p49
        %s317 = sand.u32 %s65, 1
        %s318 = scalar_lea.sflag [#allocation6], %s317
        %s319 = sand.u32 %s65, 1
        %s320 = smul.addr %s319, 8
        %s321 = scalar_lea.vmem [#allocation5], %s320
        %p322 = pneg %p78
        %p323 = pneg %p75
        %p324 = pneg %p99
        %p325 = pneg %p96
        %p326 = pneg %p120
        %p327 = pneg %p117
        %p328 = pneg %p141
        %p329 = pneg %p138
        %p330 = pneg %p162
        %p331 = pneg %p159
        %p332 = pneg %p188
        %p333 = pneg %p185
        %s334 = sand.u32 %s175, 1
        %s335 = scalar_lea.sflag [#allocation4], %s334
        %s336 = sand.u32 %s175, 1
        %s337 = smul.addr %s336, 8
        %s338 = scalar_lea.vmem [#allocation7], %s337
        %p339 = pneg %p214
        %p340 = pneg %p211
        %s341 = sand.u32 %s201, 1
        %s342 = scalar_lea.sflag [#allocation9], %s341
        %s343 = sand.u32 %s201, 1
        %s344 = smul.addr %s343, 8
        %s345 = scalar_lea.vmem [#allocation8], %s344
        %v346 = vld [vmem:[%s294] sm:$0xff]
        %vm347 = vcmask 261120
        %v348 = vsel %vm347, %v346, 0.0
        %349 = vadd.xlane.f32.xlu0 %v348
        %v350 = vpop.xlane.xlu0 %349
        %v351 = vmul.f32 %v350, 0.03125
        %v352 = vsub.f32 %v346, %v351
        %v353 = vmul.f32 %v352, %v352
        %v354 = vsel %vm347, %v353, 0.0
        %355 = vadd.xlane.f32.xlu0 %v354
        %v356 = vpop.xlane.xlu0 %355
        %v357 = vmul.f32 %v356, 0.03125
        %v358 = vadd.f32 %v357, 1e-05
        %v359 = vrsqrt.pop %v358
        %v360 = vmul.f32 %v359, %v358
        %v361 = vmul.f32 %v360, %v359
        %v362 = vmul.f32 0.5, %v361
        %v363 = vsub.f32 1.5, %v362
        %v364 = vmul.f32 %v359, %v363
        %vm365 = vweird.f32 %v358
        %vm366 = vweird.f32 %v359
        %vm367 = vmor %vm365, %vm366
        %v368 = vsel %vm367, %v359, %v364
        %v369 = vmul.f32 %v352, %v368
        %v370 = vld [vmem:[%s2] sm:$0x1]
        %v372 = vperm.slane %v370, 0
        %v374 = vmul.f32 %v369, %v372
        %v375 = vld [vmem:[%s3] sm:$0x1]
        %v377 = vperm.slane %v375, 0
        %v379 = vadd.f32 %v374, %v377
        %380 = vst.msk [vmem:[%s338] sm:$0xff] %vm347, %v379
        %v381 = vld [vmem:[%s304] sm:$0xff]
        %v382 = vsel %vm347, %v381, 0.0
        %383 = vadd.xlane.f32.xlu0 %v382
        %v384 = vpop.xlane.xlu0 %383
        %v385 = vmul.f32 %v384, 0.03125
        %v386 = vsub.f32 %v381, %v385
        %v387 = vmul.f32 %v386, %v386
        %v388 = vsel %vm347, %v387, 0.0
        %389 = vadd.xlane.f32.xlu0 %v388
        %v390 = vpop.xlane.xlu0 %389
        %v391 = vmul.f32 %v390, 0.03125
        %v392 = vadd.f32 %v391, 1e-05
        %v393 = vrsqrt.pop %v392
        %v394 = vmul.f32 %v393, %v392
        %v395 = vmul.f32 %v394, %v393
        %v396 = vmul.f32 0.5, %v395
        %v397 = vsub.f32 1.5, %v396
        %v398 = vmul.f32 %v393, %v397
        %vm399 = vweird.f32 %v392
        %vm400 = vweird.f32 %v393
        %vm401 = vmor %vm399, %vm400
        %v402 = vsel %vm401, %v393, %v398
        %v403 = vmul.f32 %v386, %v402
        %v404 = vld [vmem:[%s4] sm:$0x1]
        %v406 = vperm.slane %v404, 0
        %v408 = vmul.f32 %v403, %v406
        %v409 = vld [vmem:[%s5] sm:$0x1]
        %v411 = vperm.slane %v409, 0
        %v413 = vadd.f32 %v408, %v411
        %414 = vst.msk [vmem:[%s345] sm:$0xff] %vm347, %v413
        %s415 = sand.u32 %s175, 1
        %s416 = scalar_lea.sflag [#allocation4], %s415
        %s417 = sand.u32 %s175, 1
        %s418 = smul.addr %s417, 8
        %s419 = scalar_lea.vmem [#allocation7], %s418
        %s420 = sand.u32 %s201, 1
        %s421 = scalar_lea.sflag [#allocation9], %s420
        %s422 = sand.u32 %s201, 1
        %s423 = smul.addr %s422, 8
        %s424 = scalar_lea.vmem [#allocation8], %s423
        // Predicated region
        $region53: #{tpu_custom_call.1} parent=43 // pred_check
          %p425 = pneg %p185
        $region54: #{tpu_custom_call.1} parent=43 // pred_check_branch
          %427 = sbr.rel (%p425) target = $region56
        $region55: #{tpu_custom_call.1} parent=43 // pred_region
          %429 = vsyncadd %s416, 0
          %s430 = smul.addr %s31, 8
          %s431 = scalar_lea.hbm %s6, %s430
          %s433 = sshll.u32 %s419, 4
          %s434 = int_to_ptr.vmem [resolvable:$true] %s433
          %s435 = sshll.u32 %s431, 4
          %s436 = int_to_ptr.hbm [resolvable:$true] %s435
          %438 = dma.vmem_to_hbm [thread:$0]  %s434, 128, %s436, %s416
        $region56: #{tpu_custom_call.1} parent=43 // pred_fallthru
          _
        // Predicated region
        $region57: #{tpu_custom_call.1} parent=43 // pred_check
          %p439 = pneg %p211
        $region58: #{tpu_custom_call.1} parent=43 // pred_check_branch
          %441 = sbr.rel (%p439) target = $region60
        $region59: #{tpu_custom_call.1} parent=43 // pred_region
          %443 = vsyncadd %s421, 0
          %s444 = smul.addr %s31, 8
          %s445 = scalar_lea.hbm %s7, %s444
          %s447 = sshll.u32 %s424, 4
          %s448 = int_to_ptr.vmem [resolvable:$true] %s447
          %s449 = sshll.u32 %s445, 4
          %s450 = int_to_ptr.hbm [resolvable:$true] %s449
          %452 = dma.vmem_to_hbm [thread:$0]  %s448, 128, %s450, %s421
        $region60: #{tpu_custom_call.1} parent=43 // pred_fallthru
          _
      $region44: #{tpu_custom_call.1} parent=5 // pred_fallthru
        _
      %p453 = scmp.le.s32.totalorder 2, %s26
      // Predicated region
      $region61: #{tpu_custom_call.1} parent=5 // pred_check
        %p454 = pneg %p453
      $region62: #{tpu_custom_call.1} parent=5 // pred_check_branch
        %456 = sbr.rel (%p454) target = $region64
      $region63: #{tpu_custom_call.1} parent=5 // pred_region
        %s457 = ssub.s32 %s26, 2
        // Predicated region
        $region65: #{tpu_custom_call.1} parent=63 // pred_check
          %p458 = pneg %p191
        $region66: #{tpu_custom_call.1} parent=63 // pred_check_branch
          %460 = sbr.rel (%p458) target = $region68
        $region67: #{tpu_custom_call.1} parent=63 // pred_region
          %s461 = sand.u32 %s176, 1
          %s462 = scalar_lea.sflag [#allocation4], %s461
          %s463 = sand.u32 %s176, 1
          %s464 = smul.addr %s463, 8
          %s465 = scalar_lea.vmem [#allocation7], %s464
          %467 = dma.done %s462, 128
        $region68: #{tpu_custom_call.1} parent=63 // pred_fallthru
          _
        // Predicated region
        $region69: #{tpu_custom_call.1} parent=63 // pred_check
          %p468 = pneg %p217
        $region70: #{tpu_custom_call.1} parent=63 // pred_check_branch
          %470 = sbr.rel (%p468) target = $region72
        $region71: #{tpu_custom_call.1} parent=63 // pred_region
          %s471 = sand.u32 %s202, 1
          %s472 = scalar_lea.sflag [#allocation9], %s471
          %s473 = sand.u32 %s202, 1
          %s474 = smul.addr %s473, 8
          %s475 = scalar_lea.vmem [#allocation8], %s474
          %477 = dma.done %s472, 128
        $region72: #{tpu_custom_call.1} parent=63 // pred_fallthru
          _
      $region64: #{tpu_custom_call.1} parent=5 // pred_fallthru
        _
    $region6: #{tpu_custom_call.1} parent=1 // loop_footer
      %s30 = sadd.s32 1, %s26
    $region7: #{tpu_custom_call.1} parent=1 // loop_footer_branch
      %25 = sbr.rel target = $region3
    $region8: #{tpu_custom_call.1} parent=1 // loop_exit
      _
    %478 = vsyncpa [#allocation3], 1
    %s479 = scalar_lea.sflag [#allocation3], 1
    %480 = vsyncpa %s479, 1
    %481 = vsyncpa [#allocation6], 1
    %s482 = scalar_lea.sflag [#allocation6], 1
    %483 = vsyncpa %s482, 1
    %484 = vsyncpa [#allocation4], 1
    %s485 = scalar_lea.sflag [#allocation4], 1
    %486 = vsyncpa %s485, 1
    %487 = vsyncpa [#allocation9], 1
    %s488 = scalar_lea.sflag [#allocation9], 1
    %489 = vsyncpa %s488, 1

</llo_original>
